<compile_context>
chip_gen: v7x
topology: tpu7x:2x2x1
jax: 0.10.0
libtpu: 0.0.40
codegen_flags: <defaults>
</compile_context>

<pallas_src>
import jax
import jax.numpy as jnp
from jax.experimental import pallas as pl
from jax.experimental.pallas import tpu as pltpu

_LANE = 128      # vreg lane width
_SUBLANE = 8     # vreg sublane count (f32)


def _round_up(x, m):
    return (x + m - 1) // m * m


# ----------------------------------------------------------------------------
# Kernel
# ----------------------------------------------------------------------------
def _make_mlp_kernel(layer_dims, w_row_offsets, matmul_dtype):
    """MLP kernel: n_layers x (Linear -> tanh) then Linear, batch-major layout.

    layer_dims:     [(in_d, out_d)] per linear layer.
    w_row_offsets:  row offset of each layer's [in_d, out_d] block inside the
                    packed weight operand (per-layer rows sublane-padded).
    """
    n_linear = len(layer_dims)

    def kernel(x_ref, w_ref, b_ref, mean_ref):
        # x_ref: [tb, ob_dim] f32, batch rows on sublanes.  Edge-tile rows past
        # B may hold garbage; rows are independent (contraction over features
        # only) and their output rows are masked on store, so this is safe.
        h = x_ref[...].astype(matmul_dtype)
        for l, (in_d, out_d) in enumerate(layer_dims):
            off = w_row_offsets[l]
            w = w_ref[off:off + in_d, :out_d]          # [in_d, out_d] matmul_dtype
            b = b_ref[l:l + 1, :out_d]                 # [1, out_d]   f32
            # MXU matmul with f32 accumulation; bias add in f32.
            h = jnp.dot(h, w, preferred_element_type=jnp.float32) + b
            if l < n_linear - 1:
                # f32 elementwise (safe on v5e: no bf16 VPU/EUP); cast back to
                # the MXU input width for the next layer.
                h = jnp.tanh(h).astype(matmul_dtype)
        mean_ref[...] = h.astype(mean_ref.dtype)       # [tb, ac_dim] batch-major

    return kernel


# ----------------------------------------------------------------------------
# Wrapper helpers
# ----------------------------------------------------------------------------
def _pack_params(weights, biases, matmul_dtype):
    """Pack per-layer weights/biases into two small resident operands."""
    out_dims = [int(w.shape[1]) for w in weights]
    max_out = max(out_dims)

    w_row_offsets, w_blocks, off = [], [], 0
    for w in weights:
        in_d, out_d = int(w.shape[0]), int(w.shape[1])
        blk = w.astype(matmul_dtype)
        if out_d < max_out:                            # zero-pad narrow layers
            blk = jnp.pad(blk, ((0, 0), (0, max_out - out_d)))
        rows = _round_up(in_d, _SUBLANE)               # sublane-aligned slices
        if rows != in_d:
            blk = jnp.pad(blk, ((0, rows - in_d), (0, 0)))
        w_row_offsets.append(off)
        w_blocks.append(blk)
        off += rows
    w_cat = jnp.concatenate(w_blocks, axis=0)          # [sum(rows), max_out]

    b_rows = []
    for out_d, b in zip(out_dims, biases):
        row = jnp.reshape(b, (-1,)).astype(jnp.float32)
        if out_d < max_out:
            row = jnp.pad(row, (0, max_out - out_d))
        b_rows.append(row)
    b_cat = jnp.stack(b_rows, axis=0)                  # [n_linear, max_out] f32

    return w_cat, b_cat, w_row_offsets


def _pick_batch_tile(B, block_b):
    if block_b is None:
        # ~16 grid steps so per-step pipeline overhead (~0.35us) amortizes,
        # capped at 8192 rows: batch-major blocks lane-pad the feature dim to
        # 128, so 8192 rows ~= 4 MiB/buffer -- fits every target chip's VMEM
        # (incl. v7x) with double buffering + live temps.
        tb = max(512, min(8192, pl.cdiv(B, 16)))
    else:
        tb = int(block_b)
    tb = min(tb, _round_up(B, _SUBLANE))               # never bigger than needed
    return _round_up(tb, _SUBLANE)                     # (8, .) BlockSpec rule


def _vmem_bytes_estimate(tb, ob_dim, ac_dim, out_dims):
    lane = lambda d: _round_up(max(int(d), 1), _LANE)
    f32 = 4
    io = 2 * tb * lane(ob_dim) * f32 + 2 * tb * lane(ac_dim) * f32  # dbl-buffered I/O
    widest = max(list(out_dims) + [ob_dim, ac_dim])
    temps = 4 * tb * lane(widest) * f32                             # live activations
    return io + temps


def _mlp_ref(obs, weights, biases, matmul_dtype=jnp.float32):
    """Plain-XLA MLP (also the small-batch fast path); mirrors kernel numerics."""
    h = obs
    n = len(weights)
    for l, (w, b) in enumerate(zip(weights, biases)):
        h = jnp.dot(h.astype(matmul_dtype), w.astype(matmul_dtype),
                    preferred_element_type=jnp.float32)
        h = h + jnp.reshape(b, (1, -1)).astype(jnp.float32)
        if l < n - 1:
            h = jnp.tanh(h)
    return h


def _mlp_pallas(obs, weights, biases, block_b, matmul_dtype):
    B, ob_dim = obs.shape
    ac_dim = int(weights[-1].shape[1])
    out_dims = [int(w.shape[1]) for w in weights]
    layer_dims = [(int(w.shape[0]), int(w.shape[1])) for w in weights]

    w_cat, b_cat, w_row_offsets = _pack_params(weights, biases, matmul_dtype)
    kernel = _make_mlp_kernel(layer_dims, w_row_offsets, matmul_dtype)

    tb = _pick_batch_tile(B, block_b)
    grid = (pl.cdiv(B, tb),)                           # edge block masked by Pallas

    cparams = {"dimension_semantics": ("parallel",)}   # v7x: 2-TC batch split
    vmem_need = _vmem_bytes_estimate(tb, ob_dim, ac_dim, out_dims)
    if vmem_need > 16 * 1024 * 1024:
        # Raise the scoped-VMEM limit only when the big-tile path needs it;
        # 48 MiB is below every target chip's physical VMEM (v7x: 64 MiB).
        cparams["vmem_limit_bytes"] = min(
            _round_up(vmem_need * 3 // 2, 1 << 20), 48 * 1024 * 1024)

    mean = pl.pallas_call(
        kernel,
        out_shape=jax.ShapeDtypeStruct((B, ac_dim), jnp.float32),
        grid_spec=pltpu.PrefetchScalarGridSpec(
            num_scalar_prefetch=0,
            grid=grid,
            in_specs=[
                pl.BlockSpec((tb, ob_dim), lambda i: (i, 0)),   # obs: streamed
                pl.BlockSpec(w_cat.shape, lambda i: (0, 0)),    # weights: resident
                pl.BlockSpec(b_cat.shape, lambda i: (0, 0)),    # biases:  resident
            ],
            out_specs=pl.BlockSpec((tb, ac_dim), lambda i: (i, 0)),
        ),
        compiler_params=pltpu.CompilerParams(**cparams),
    )(obs.astype(jnp.float32), w_cat, b_cat)
    return mean


# ----------------------------------------------------------------------------
# Public forward
# ----------------------------------------------------------------------------
def mlp_policy_forward(obs, weights, biases, logstd, *, block_b=None,
                       matmul_dtype=jnp.float32, min_pallas_batch=512):
    """Forward pass of the continuous MLPPolicy.

    Args:
      obs:      [B, ob_dim] float32
      weights:  list of [in, out] float32 (n_layers hidden + 1 output layer)
      biases:   list of [out] (or [1, out]) float32
      logstd:   [ac_dim] float32
      block_b:  batch tile (rows per grid step); None -> auto (~16 steps, <=8192)
      matmul_dtype: MXU input dtype (f32 default = exact module numerics;
                    bf16 opt-in for speed)
      min_pallas_batch: below this many rows, use the plain-XLA path (a 1-step
                    grid is pure pallas_call launch/DMA overhead).

    Returns:
      mean: [B, ac_dim] float32 (squeezed to [B] if ac_dim == 1)
      std:  [ac_dim]    float32  (= exp(logstd), computed outside the kernel)
    """
    B, _ = obs.shape
    ac_dim = int(weights[-1].shape[1])

    std = jnp.exp(logstd)                              # obs-independent, plain JAX

    if B < min_pallas_batch:
        mean = _mlp_ref(obs, weights, biases, matmul_dtype)
    else:
        mean = _mlp_pallas(obs, weights, biases, block_b, matmul_dtype)

    if ac_dim == 1:
        mean = mean[..., 0]                            # torch's squeeze(dim=-1)
    return mean, std


# ----------------------------------------------------------------------------
# Reference + deterministic init
# ----------------------------------------------------------------------------
def reference_forward(obs, weights, biases, logstd, matmul_dtype=jnp.float32):
    mean = _mlp_ref(obs, weights, biases, matmul_dtype)
    if int(weights[-1].shape[1]) == 1:
        mean = mean[..., 0]
    return mean, jnp.exp(logstd)


def init_params(key, ob_dim, ac_dim, n_layers, size):
    """Deterministic init mimicking nn.Linear default (U[-1/sqrt(in), 1/sqrt(in)])."""
    dims = [ob_dim] + [size] * n_layers + [ac_dim]
    weights, biases = [], []
    for l in range(len(dims) - 1):
        key, kw, kb = jax.random.split(key, 3)
        bound = 1.0 / jnp.sqrt(jnp.float32(dims[l]))
        w = jax.random.uniform(kw, (dims[l], dims[l + 1]), jnp.float32, -bound, bound)
        b = jax.random.uniform(kb, (dims[l + 1],), jnp.float32, -bound, bound)
        weights.append(w)
        biases.append(b)
    # logstd is initialized to zeros in MLPPolicy.__init__
    logstd = jnp.zeros((ac_dim,), dtype=jnp.float32)
    return weights, biases, logstd


# ----------------------------------------------------------------------------
# Demo / self-test
# ----------------------------------------------------------------------------
if __name__ == "__main__":
    B, ob_dim, ac_dim, n_layers, size = 8, 16, 4, 2, 32

    key = jax.random.PRNGKey(0)
    key, k_obs = jax.random.split(key)
    obs = jax.random.normal(k_obs, (B, ob_dim), dtype=jnp.float32)
    weights, biases, logstd = init_params(key, ob_dim, ac_dim, n_layers, size)

    # 1) Small-batch demo, exact f32 path; force the Pallas kernel.
    mean_f32, std = mlp_policy_forward(obs, weights, biases, logstd,
                                       min_pallas_batch=0)
    # 2) Opt-in bf16 MXU inputs.
    mean_bf, _ = mlp_policy_forward(obs, weights, biases, logstd,
                                    matmul_dtype=jnp.bfloat16, min_pallas_batch=0)
    # 3) Multi-step grid with a masked edge block (B not a multiple of tb).
    key, k_big = jax.random.split(key)
    B_big = 300
    obs_big = jax.random.normal(k_big, (B_big, ob_dim), dtype=jnp.float32)
    mean_big, _ = mlp_policy_forward(obs_big, weights, biases, logstd,
                                     block_b=128, min_pallas_batch=0)
    jax.block_until_ready((mean_f32, mean_bf, mean_big, std))

    ref_f32, ref_std = reference_forward(obs, weights, biases, logstd)
    ref_bf, _ = reference_forward(obs, weights, biases, logstd, jnp.bfloat16)
    ref_big, _ = reference_forward(obs_big, weights, biases, logstd)

    assert mean_f32.shape == (B, ac_dim) and std.shape == (ac_dim,)
    assert mean_big.shape == (B_big, ac_dim)
    assert jnp.allclose(mean_f32, ref_f32, atol=1e-4, rtol=1e-4), "f32 mean mismatch"
    assert jnp.allclose(mean_big, ref_big, atol=1e-4, rtol=1e-4), "edge-block mismatch"
    assert jnp.allclose(mean_bf, ref_bf, atol=5e-3, rtol=5e-3), "bf16 mean mismatch"
    assert jnp.allclose(mean_bf, ref_f32, atol=5e-2, rtol=5e-2), "bf16 sanity vs f32"
    assert jnp.allclose(std, ref_std, atol=1e-6), "std mismatch"

    # 4) ac_dim == 1 -> torch's squeeze(dim=-1) behavior.
    w1, b1, ls1 = init_params(jax.random.PRNGKey(1), ob_dim, 1, n_layers, size)
    mean_1, std_1 = mlp_policy_forward(obs, w1, b1, ls1, min_pallas_batch=0)
    ref_1, _ = reference_forward(obs, w1, b1, ls1)
    jax.block_until_ready((mean_1, std_1))
    assert mean_1.shape == (B,) and std_1.shape == (1,)
    assert jnp.allclose(mean_1, ref_1, atol=1e-4, rtol=1e-4), "ac_dim=1 mismatch"

    # TODO(synk): Normal(...).sample() (get_action) and the discrete
    # Categorical branch are not part of this forward translation; only the
    # distribution parameters (mean, std) are produced.
    print("KERNEL_OK")
</pallas_src>

<mosaic_0001>
module attributes {stable_mosaic.version = 11 : i64} {
  func.func @kernel(%arg0: i32, %arg1: memref<8x16xf32, #tpu.memory_space<vmem>>, %arg2: memref<80x32xf32, #tpu.memory_space<vmem>>, %arg3: memref<3x32xf32, #tpu.memory_space<vmem>>, %arg4: memref<8x4xf32, #tpu.memory_space<vmem>>) attributes {dimension_semantics = [#tpu.dimension_semantics<parallel>], iteration_bounds = array<i64: 1>, scalar_prefetch = 0 : i64, scratch_operands = 0 : i64, tpu.core_type = #tpu.core_type<tc>, window_params = [{transform_indices = @transform_0, window_bounds = array<i64: 8, 16>}, {pipeline_mode = #tpu.pipeline_mode<synchronous>, transform_indices = @transform_1, window_bounds = array<i64: 80, 32>}, {pipeline_mode = #tpu.pipeline_mode<synchronous>, transform_indices = @transform_2, window_bounds = array<i64: 3, 32>}, {transform_indices = @transform_3, window_bounds = array<i64: 8, 4>}]} {
    %c0 = arith.constant 0 : index
    %c0_0 = arith.constant 0 : index
    %0 = vector.load %arg1[%c0, %c0_0] : memref<8x16xf32, #tpu.memory_space<vmem>>, vector<8x16xf32>
    %c0_1 = arith.constant 0 : index
    %c0_2 = arith.constant 0 : index
    %1 = vector.load %arg2[%c0_1, %c0_2] : memref<80x32xf32, #tpu.memory_space<vmem>>, vector<16x32xf32>
    %c0_3 = arith.constant 0 : index
    %c0_4 = arith.constant 0 : index
    %2 = vector.load %arg3[%c0_3, %c0_4] : memref<3x32xf32, #tpu.memory_space<vmem>>, vector<1x32xf32>
    %cst = arith.constant dense<0.000000e+00> : vector<8x32xf32>
    %3 = tpu.matmul %0, %1, %cst {dimension_numbers = #tpu.dot_dimension_numbers<[1], [0], [0], [1], [0, 0, 1, 1], [], []>} : vector<8x16xf32>, vector<16x32xf32>, vector<8x32xf32> -> vector<8x32xf32>
    %4 = vector.broadcast %2 : vector<1x32xf32> to vector<8x32xf32>
    %5 = arith.addf %3, %4 : vector<8x32xf32>
    %6 = math.tanh %5 : vector<8x32xf32>
    %c16 = arith.constant 16 : index
    %c0_5 = arith.constant 0 : index
    %7 = vector.load %arg2[%c16, %c0_5] : memref<80x32xf32, #tpu.memory_space<vmem>>, vector<32x32xf32>
    %c1 = arith.constant 1 : index
    %c0_6 = arith.constant 0 : index
    %8 = vector.load %arg3[%c1, %c0_6] : memref<3x32xf32, #tpu.memory_space<vmem>>, vector<1x32xf32>
    %cst_7 = arith.constant dense<0.000000e+00> : vector<8x32xf32>
    %9 = tpu.matmul %6, %7, %cst_7 {dimension_numbers = #tpu.dot_dimension_numbers<[1], [0], [0], [1], [0, 0, 1, 1], [], []>} : vector<8x32xf32>, vector<32x32xf32>, vector<8x32xf32> -> vector<8x32xf32>
    %10 = vector.broadcast %8 : vector<1x32xf32> to vector<8x32xf32>
    %11 = arith.addf %9, %10 : vector<8x32xf32>
    %12 = math.tanh %11 : vector<8x32xf32>
    %c48 = arith.constant 48 : index
    %c0_8 = arith.constant 0 : index
    %13 = vector.load %arg2[%c48, %c0_8] : memref<80x32xf32, #tpu.memory_space<vmem>>, vector<32x4xf32>
    %c2 = arith.constant 2 : index
    %c0_9 = arith.constant 0 : index
    %14 = vector.load %arg3[%c2, %c0_9] : memref<3x32xf32, #tpu.memory_space<vmem>>, vector<1x4xf32>
    %cst_10 = arith.constant dense<0.000000e+00> : vector<8x4xf32>
    %15 = tpu.matmul %12, %13, %cst_10 {dimension_numbers = #tpu.dot_dimension_numbers<[1], [0], [0], [1], [0, 0, 1, 1], [], []>} : vector<8x32xf32>, vector<32x4xf32>, vector<8x4xf32> -> vector<8x4xf32>
    %16 = vector.broadcast %14 : vector<1x4xf32> to vector<8x4xf32>
    %17 = arith.addf %15, %16 : vector<8x4xf32>
    %c0_11 = arith.constant 0 : index
    %c0_12 = arith.constant 0 : index
    %18 = vector.load %arg4[%c0_11, %c0_12] : memref<8x4xf32, #tpu.memory_space<vmem>>, vector<8x4xf32>
    tpu.vector_store %arg4[%c0_11, %c0_12], %17 {strides = array<i32>} : memref<8x4xf32, #tpu.memory_space<vmem>>, vector<8x4xf32>,
    return
  }
  func.func @transform_0(%arg0: i32) -> (i32, i32) {
    %c0_i32 = arith.constant 0 : i32
    %c0_i32_0 = arith.constant 0 : i32
    return %arg0, %c0_i32 : i32, i32
  }
  func.func @transform_1(%arg0: i32) -> (i32, i32) {
    %c0_i32 = arith.constant 0 : i32
    %c0_i32_0 = arith.constant 0 : i32
    %c0_i32_1 = arith.constant 0 : i32
    return %c0_i32, %c0_i32_0 : i32, i32
  }
  func.func @transform_2(%arg0: i32) -> (i32, i32) {
    %c0_i32 = arith.constant 0 : i32
    %c0_i32_0 = arith.constant 0 : i32
    %c0_i32_1 = arith.constant 0 : i32
    return %c0_i32, %c0_i32_0 : i32, i32
  }
  func.func @transform_3(%arg0: i32) -> (i32, i32) {
    %c0_i32 = arith.constant 0 : i32
    %c0_i32_0 = arith.constant 0 : i32
    return %arg0, %c0_i32 : i32, i32
  }
}

</mosaic_0001>

<llo_original>
// kernel: tpu_custom_call.1
$region0: #{tpu_custom_call.1}
  #allocation0 [shape = 'u32[]', space=smem, size = 0x4, offset = 0x4, fixed_abs, tag = 'smem constant byte address 0x4 - core index']
  #allocation1 [shape = 'u32[144,128]{1,0:T(1,128)}', space=vmem, size = 0x12000, scoped, tag = 'internal scratch']
  %s0 = inlined_call_operand.vmem [shape: f32[8,16], index: 0, kind: input, shape index: {}]
  %s1 = inlined_call_operand.vmem [shape: f32[80,32], index: 1, kind: input, shape index: {}]
  %s2 = inlined_call_operand.vmem [shape: f32[3,32], index: 2, kind: input, shape index: {}]
  %s3 = inlined_call_operand.vmem [shape: f32[8,4], index: 3, kind: output, shape index: {}]
  %s4 = sld [smem:[#allocation0]]
  $region22: #{tpu_custom_call.1} parent=0
    _
  %s6 = ssub.s32 1, %s4
  %s7 = scalar_select 0, %s6, %s4
  // Predicated region
  $region2: #{tpu_custom_call.1} parent=0 // pred_check
    _
  $region3: #{tpu_custom_call.1} parent=0 // pred_check_branch
    %9 = sbr.rel (0) target = $region5
  $region4: #{tpu_custom_call.1} parent=0 // pred_region
    _
  $region5: #{tpu_custom_call.1} parent=0 // pred_fallthru
    _
  // Predicated region
  $region6: #{tpu_custom_call.1} parent=0 // pred_check
    _
  $region7: #{tpu_custom_call.1} parent=0 // pred_check_branch
    %11 = sbr.rel (0) target = $region9
  $region8: #{tpu_custom_call.1} parent=0 // pred_region
    _
  $region9: #{tpu_custom_call.1} parent=0 // pred_fallthru
    _
  // Predicated region
  $region10: #{tpu_custom_call.1} parent=0 // pred_check
    _
  $region11: #{tpu_custom_call.1} parent=0 // pred_check_branch
    %13 = sbr.rel (0) target = $region13
  $region12: #{tpu_custom_call.1} parent=0 // pred_region
    _
  $region13: #{tpu_custom_call.1} parent=0 // pred_fallthru
    _
  %v14 = vld [vmem:[%s0] sm:$0xff]
  %v15 = vld [vmem:[%s1] sm:$0xff]
  %v16 = vld [vmem:[%s1 + $0x8] sm:$0xff]
  %v17 = vld [vmem:[%s2] sm:$0x1]
  %v18 = vlaneseq
  %v19 = vshrl.u32 %v18, 7
  %v20 = vsub.s32 0, %v19
  %v21 = vrot.slane %v17, %v20
  %vm22 = vcmask 130048
  %v24 = vsel %vm22, %v14, 0
  %26 = vmatprep.subr.mxu0 0.0
  %27 = vmatpush1.msra.mxu0 %v15
  %28 = vmatprep.subr.mxu0 0.0
  %29 = vmatpush1.msra.mxu0 %v16
  %30 = vmatprep.subr.mxu0 0.0
  %31 = vmatpush1.msra.mxu0 0.0
  %32 = vmatprep.subr.mxu0 0.0
  %33 = vmatpush1.msra.mxu0 0.0
  %34 = vmatprep.subr.mxu0 0.0
  %35 = vmatpush1.msra.mxu0 0.0
  %36 = vmatprep.subr.mxu0 0.0
  %37 = vmatpush1.msra.mxu0 0.0
  %38 = vmatprep.subr.mxu0 0.0
  %39 = vmatpush1.msra.mxu0 0.0
  %40 = vmatprep.subr.mxu0 0.0
  %41 = vmatpush1.msra.mxu0 0.0
  %42 = vmatprep.subr.mxu0 0.0
  %43 = vmatpush1.msra.mxu0 0.0
  %44 = vmatprep.subr.mxu0 0.0
  %45 = vmatpush1.msra.mxu0 0.0
  %46 = vmatprep.subr.mxu0 0.0
  %47 = vmatpush1.msra.mxu0 0.0
  %48 = vmatprep.subr.mxu0 0.0
  %49 = vmatpush1.msra.mxu0 0.0
  %50 = vmatprep.subr.mxu0 0.0
  %51 = vmatpush1.msra.mxu0 0.0
  %52 = vmatprep.subr.mxu0 0.0
  %53 = vmatpush1.msra.mxu0 0.0
  %54 = vmatprep.subr.mxu0 0.0
  %55 = vmatpush1.msra.mxu0 0.0
  %56 = vmatprep.subr.mxu0 0.0
  %57 = vmatpush1.msra.mxu0 0.0
  %58 = vmatprep.subr.mxu0 0.0
  %59 = vmatpush1.msra.mxu0 0.0
  %60 = vmatprep.subr.mxu0 0.0
  %61 = vmatpush1.msra.mxu0 0.0
  %62 = vmatprep.subr.mxu0 0.0
  %63 = vmatpush1.msra.mxu0 0.0
  %64 = vmatprep.subr.mxu0 0.0
  %65 = vmatpush1.msra.mxu0 0.0
  %66 = vmatprep.subr.mxu0 0.0
  %67 = vmatpush1.msra.mxu0 0.0
  %68 = vmatprep.subr.mxu0 0.0
  %69 = vmatpush1.msra.mxu0 0.0
  %70 = vmatprep.subr.mxu0 0.0
  %71 = vmatpush1.msra.mxu0 0.0
  %72 = vmatprep.subr.mxu0 0.0
  %73 = vmatpush1.msra.mxu0 0.0
  %74 = vmatprep.subr.mxu0 0.0
  %75 = vmatpush1.msra.mxu0 0.0
  %76 = vmatprep.subr.mxu0 0.0
  %77 = vmatpush1.msra.mxu0 0.0
  %78 = vmatprep.subr.mxu0 0.0
  %79 = vmatpush1.msra.mxu0 0.0
  %80 = vmatprep.subr.mxu0 0.0
  %81 = vmatpush1.msra.mxu0 0.0
  %82 = vmatprep.subr.mxu0 0.0
  %83 = vmatpush1.msra.mxu0 0.0
  %84 = vmatprep.subr.mxu0 0.0
  %85 = vmatpush1.msra.mxu0 0.0
  %86 = vmatprep.subr.mxu0 0.0
  %87 = vmatpush1.msra.mxu0 0.0
  %88 = vmatprep.subr.mxu0 0.0
  %89 = vmatpush1.msra.mxu0 0.0
  %90 = vmatprep.mubr.f32.mxu0 0.0
  %91 = vmatmul.mubr.f32.gmra.mrb[0].mxu0 %v24
  %v92 = vpop.f32.mrb[0].mxu0
  %v93 = vadd.f32 %v21, %v92
  %v94 = vpop.f32.mrb[0].mxu0
  %95 = vdwg.mxu0
  %v96 = vtanh.pop %v93
  %v97 = vld [vmem:[%s1 + $0x10] sm:$0xff]
  %v98 = vld [vmem:[%s1 + $0x18] sm:$0xff]
  %v99 = vld [vmem:[%s1 + $0x20] sm:$0xff]
  %v100 = vld [vmem:[%s1 + $0x28] sm:$0xff]
  %v101 = vld [vmem:[%s2 + $0x1] sm:$0x1]
  %v102 = vlaneseq
  %v103 = vshrl.u32 %v102, 7
  %v104 = vsub.s32 0, %v103
  %v105 = vrot.slane %v101, %v104
  %vm106 = vcmask 261120
  %v108 = vsel %vm106, %v96, 0
  %110 = vmatprep.subr.mxu0 0.0
  %111 = vmatpush1.msra.mxu0 %v97
  %112 = vmatprep.subr.mxu0 0.0
  %113 = vmatpush1.msra.mxu0 %v98
  %114 = vmatprep.subr.mxu0 0.0
  %115 = vmatpush1.msra.mxu0 %v99
  %116 = vmatprep.subr.mxu0 0.0
  %117 = vmatpush1.msra.mxu0 %v100
  %118 = vmatprep.subr.mxu0 0.0
  %119 = vmatpush1.msra.mxu0 0.0
  %120 = vmatprep.subr.mxu0 0.0
  %121 = vmatpush1.msra.mxu0 0.0
  %122 = vmatprep.subr.mxu0 0.0
  %123 = vmatpush1.msra.mxu0 0.0
  %124 = vmatprep.subr.mxu0 0.0
  %125 = vmatpush1.msra.mxu0 0.0
  %126 = vmatprep.subr.mxu0 0.0
  %127 = vmatpush1.msra.mxu0 0.0
  %128 = vmatprep.subr.mxu0 0.0
  %129 = vmatpush1.msra.mxu0 0.0
  %130 = vmatprep.subr.mxu0 0.0
  %131 = vmatpush1.msra.mxu0 0.0
  %132 = vmatprep.subr.mxu0 0.0
  %133 = vmatpush1.msra.mxu0 0.0
  %134 = vmatprep.subr.mxu0 0.0
  %135 = vmatpush1.msra.mxu0 0.0
  %136 = vmatprep.subr.mxu0 0.0
  %137 = vmatpush1.msra.mxu0 0.0
  %138 = vmatprep.subr.mxu0 0.0
  %139 = vmatpush1.msra.mxu0 0.0
  %140 = vmatprep.subr.mxu0 0.0
  %141 = vmatpush1.msra.mxu0 0.0
  %142 = vmatprep.subr.mxu0 0.0
  %143 = vmatpush1.msra.mxu0 0.0
  %144 = vmatprep.subr.mxu0 0.0
  %145 = vmatpush1.msra.mxu0 0.0
  %146 = vmatprep.subr.mxu0 0.0
  %147 = vmatpush1.msra.mxu0 0.0
  %148 = vmatprep.subr.mxu0 0.0
  %149 = vmatpush1.msra.mxu0 0.0
  %150 = vmatprep.subr.mxu0 0.0
  %151 = vmatpush1.msra.mxu0 0.0
  %152 = vmatprep.subr.mxu0 0.0
  %153 = vmatpush1.msra.mxu0 0.0
  %154 = vmatprep.subr.mxu0 0.0
  %155 = vmatpush1.msra.mxu0 0.0
  %156 = vmatprep.subr.mxu0 0.0
  %157 = vmatpush1.msra.mxu0 0.0
  %158 = vmatprep.subr.mxu0 0.0
  %159 = vmatpush1.msra.mxu0 0.0
  %160 = vmatprep.subr.mxu0 0.0
  %161 = vmatpush1.msra.mxu0 0.0
  %162 = vmatprep.subr.mxu0 0.0
  %163 = vmatpush1.msra.mxu0 0.0
  %164 = vmatprep.subr.mxu0 0.0
  %165 = vmatpush1.msra.mxu0 0.0
  %166 = vmatprep.subr.mxu0 0.0
  %167 = vmatpush1.msra.mxu0 0.0
  %168 = vmatprep.subr.mxu0 0.0
  %169 = vmatpush1.msra.mxu0 0.0
  %170 = vmatprep.subr.mxu0 0.0
  %171 = vmatpush1.msra.mxu0 0.0
  %172 = vmatprep.subr.mxu0 0.0
  %173 = vmatpush1.msra.mxu0 0.0
  %174 = vmatprep.mubr.f32.mxu0 0.0
  %175 = vmatmul.mubr.f32.gmra.mrb[0].mxu0 %v108
  %v176 = vpop.f32.mrb[0].mxu0
  %v177 = vadd.f32 %v105, %v176
  %v178 = vpop.f32.mrb[0].mxu0
  %179 = vdwg.mxu0
  %v180 = vtanh.pop %v177
  %v181 = vld [vmem:[%s1 + $0x30] sm:$0xff]
  %v182 = vld [vmem:[%s1 + $0x38] sm:$0xff]
  %v183 = vld [vmem:[%s1 + $0x40] sm:$0xff]
  %v184 = vld [vmem:[%s1 + $0x48] sm:$0xff]
  %v185 = vld [vmem:[%s2 + $0x2] sm:$0x1]
  %v186 = vlaneseq
  %v187 = vshrl.u32 %v186, 7
  %v188 = vsub.s32 0, %v187
  %v189 = vrot.slane %v185, %v188
  %v191 = vsel %vm106, %v180, 0
  %193 = vmatprep.subr.mxu0 0.0
  %194 = vmatpush1.msra.mxu0 %v181
  %195 = vmatprep.subr.mxu0 0.0
  %196 = vmatpush1.msra.mxu0 %v182
  %197 = vmatprep.subr.mxu0 0.0
  %198 = vmatpush1.msra.mxu0 %v183
  %199 = vmatprep.subr.mxu0 0.0
  %200 = vmatpush1.msra.mxu0 %v184
  %201 = vmatprep.subr.mxu0 0.0
  %202 = vmatpush1.msra.mxu0 0.0
  %203 = vmatprep.subr.mxu0 0.0
  %204 = vmatpush1.msra.mxu0 0.0
  %205 = vmatprep.subr.mxu0 0.0
  %206 = vmatpush1.msra.mxu0 0.0
  %207 = vmatprep.subr.mxu0 0.0
  %208 = vmatpush1.msra.mxu0 0.0
  %209 = vmatprep.subr.mxu0 0.0
  %210 = vmatpush1.msra.mxu0 0.0
  %211 = vmatprep.subr.mxu0 0.0
  %212 = vmatpush1.msra.mxu0 0.0
  %213 = vmatprep.subr.mxu0 0.0
  %214 = vmatpush1.msra.mxu0 0.0
  %215 = vmatprep.subr.mxu0 0.0
  %216 = vmatpush1.msra.mxu0 0.0
  %217 = vmatprep.subr.mxu0 0.0
  %218 = vmatpush1.msra.mxu0 0.0
  %219 = vmatprep.subr.mxu0 0.0
  %220 = vmatpush1.msra.mxu0 0.0
  %221 = vmatprep.subr.mxu0 0.0
  %222 = vmatpush1.msra.mxu0 0.0
  %223 = vmatprep.subr.mxu0 0.0
  %224 = vmatpush1.msra.mxu0 0.0
  %225 = vmatprep.subr.mxu0 0.0
  %226 = vmatpush1.msra.mxu0 0.0
  %227 = vmatprep.subr.mxu0 0.0
  %228 = vmatpush1.msra.mxu0 0.0
  %229 = vmatprep.subr.mxu0 0.0
  %230 = vmatpush1.msra.mxu0 0.0
  %231 = vmatprep.subr.mxu0 0.0
  %232 = vmatpush1.msra.mxu0 0.0
  %233 = vmatprep.subr.mxu0 0.0
  %234 = vmatpush1.msra.mxu0 0.0
  %235 = vmatprep.subr.mxu0 0.0
  %236 = vmatpush1.msra.mxu0 0.0
  %237 = vmatprep.subr.mxu0 0.0
  %238 = vmatpush1.msra.mxu0 0.0
  %239 = vmatprep.subr.mxu0 0.0
  %240 = vmatpush1.msra.mxu0 0.0
  %241 = vmatprep.subr.mxu0 0.0
  %242 = vmatpush1.msra.mxu0 0.0
  %243 = vmatprep.subr.mxu0 0.0
  %244 = vmatpush1.msra.mxu0 0.0
  %245 = vmatprep.subr.mxu0 0.0
  %246 = vmatpush1.msra.mxu0 0.0
  %247 = vmatprep.subr.mxu0 0.0
  %248 = vmatpush1.msra.mxu0 0.0
  %249 = vmatprep.subr.mxu0 0.0
  %250 = vmatpush1.msra.mxu0 0.0
  %251 = vmatprep.subr.mxu0 0.0
  %252 = vmatpush1.msra.mxu0 0.0
  %253 = vmatprep.subr.mxu0 0.0
  %254 = vmatpush1.msra.mxu0 0.0
  %255 = vmatprep.subr.mxu0 0.0
  %256 = vmatpush1.msra.mxu0 0.0
  %257 = vmatprep.mubr.f32.mxu0 0.0
  %258 = vmatmul.mubr.f32.gmra.mrb[0].mxu0 %v191
  %v259 = vpop.f32.mrb[0].mxu0
  %v260 = vadd.f32 %v189, %v259
  %v261 = vpop.f32.mrb[0].mxu0
  %262 = vdwg.mxu0
  %vm263 = vcmask 31744
  %264 = vst.msk [vmem:[%s3] sm:$0xff] %vm263, %v260
  // Predicated region
  $region14: #{tpu_custom_call.1} parent=0 // pred_check
    _
  $region15: #{tpu_custom_call.1} parent=0 // pred_check_branch
    %266 = sbr.rel (0) target = $region17
  $region16: #{tpu_custom_call.1} parent=0 // pred_region
    _
  $region17: #{tpu_custom_call.1} parent=0 // pred_fallthru
    _
  // Predicated region
  $region18: #{tpu_custom_call.1} parent=0 // pred_check
    _
  $region19: #{tpu_custom_call.1} parent=0 // pred_check_branch
    %268 = sbr.rel (0) target = $region21
  $region20: #{tpu_custom_call.1} parent=0 // pred_region
    _
  $region21: #{tpu_custom_call.1} parent=0 // pred_fallthru
    _

</llo_original>
